<compile_context>
chip_gen: v7x
topology: tpu7x:2x2x1
jax: 0.10.0
libtpu: 0.0.40
codegen_flags: <defaults>
</compile_context>

<pallas_src>
import jax
import jax.numpy as jnp
from jax.experimental import pallas as pl
from jax.experimental.pallas import tpu as pltpu


def _spatial_fc_direct_kernel(x_ref, w_ref, o_ref):
    # Single K block: o = x_tile @ W_tile.T, done in one MXU pass, no scratch.
    o_ref[...] = jax.lax.dot_general(
        x_ref[...], w_ref[...],
        (((1,), (1,)), ((), ())),     # contract last dim of x with last dim of W
        preferred_element_type=jnp.float32,
    ).astype(o_ref.dtype)


def _spatial_fc_acc_kernel(x_ref, w_ref, o_ref, acc_ref):
    # K-tiled reduction with an f32 VMEM accumulator; the output block stays
    # resident across the innermost "arbitrary" K axis.
    @pl.when(pl.program_id(2) == 0)
    def _():
        acc_ref[...] = jnp.zeros_like(acc_ref)

    acc_ref[...] += jax.lax.dot_general(
        x_ref[...], w_ref[...],
        (((1,), (1,)), ((), ())),
        preferred_element_type=jnp.float32,
    )

    @pl.when(pl.program_id(2) == pl.num_programs(2) - 1)
    def _():
        o_ref[...] = acc_ref[...].astype(o_ref.dtype)


def _round_up(v: int, m: int) -> int:
    return ((v + m - 1) // m) * m


def _pick_tile(dim: int, max_tile: int, quantum: int) -> int:
    """Largest tile <= max_tile that divides `dim` and is a multiple of
    `quantum`. Callers guarantee dim % quantum == 0 when dim > max_tile, so a
    legal tile (at worst `quantum`) always exists."""
    if dim <= max_tile:
        return dim
    t = (max_tile // quantum) * quantum
    while t >= quantum:
        if dim % t == 0:
            return t
        t -= quantum
    return quantum


def spatial_fc(x: jax.Array, weight: jax.Array) -> jax.Array:
    """SpatialFc forward.

    x:      (B, C, *spatial)
    weight: (N, N) nn.Linear weight (out_features, in_features), bias-free,
            N = prod(spatial).  Returns an array shaped like x.
    """
    shape = x.shape
    assert len(shape) >= 3, shape
    B, C = shape[0], shape[1]
    N = 1
    for s in shape[2:]:
        N *= s
    assert weight.shape == (N, N), (weight.shape, N)

    M = B * C
    out_dtype = x.dtype
    # Stream operands as bf16 (halves HBM bytes on the N x N weight, full bf16
    # MXU rate); accumulation stays f32 in the kernel.
    compute_dtype = jnp.bfloat16 if x.dtype == jnp.float32 else x.dtype
    elt = jnp.dtype(compute_dtype).itemsize
    sublane_q = max(8, 32 // elt)            # 8 f32, 16 bf16, 32 int8/fp8

    # --- tile selection ----------------------------------------------------
    # Caps chosen so double-buffered inputs + output + f32 accumulator stay
    # <= ~10 MiB: safe under v5e (16 MiB scoped default), v6e (32 MiB) and
    # v7x (64 MiB physical) while keeping long MXU streaks / few grid steps.
    TM_CAP, TN_CAP, TK_CAP = 256, 1024, 1024

    # Pad only when a dimension is too large to be a single full-extent block
    # (full-extent blocks are always layout-legal). Zero padding is exact here.
    Mp = M if (M <= TM_CAP or M % sublane_q == 0) else _round_up(M, sublane_q)
    Np = N if (N <= TK_CAP or N % 128 == 0) else _round_up(N, 128)

    tm = Mp if Mp <= TM_CAP else _pick_tile(Mp, TM_CAP, sublane_q)
    tk = Np if Np <= TK_CAP else _pick_tile(Np, TK_CAP, 128)
    tn = Np if Np <= TN_CAP else _pick_tile(Np, TN_CAP, 128)

    # With a single row block (typical SpatialFc: M = B*C small), split the
    # columns into >= 2 lane-dense blocks so both v7x TensorCores get work.
    if Mp <= tm and Np % 128 == 0 and Np >= 256:
        half_cap = max(128, ((Np // 2) // 128) * 128)
        tn = min(tn, _pick_tile(Np, half_cap, 128))

    mt, nt, kt = Mp // tm, Np // tn, Np // tk

    # --- lane-dense 2D operands (layout plumbing only) ----------------------
    x2 = x.reshape(M, N).astype(compute_dtype)
    w = weight.astype(compute_dtype)          # (N_out, N_in), NOT transposed
    if Mp != M or Np != N:
        x2 = jnp.pad(x2, ((0, Mp - M), (0, Np - N)))
    if Np != N:
        w = jnp.pad(w, ((0, Np - N), (0, Np - N)))

    cost = pl.CostEstimate(
        flops=2 * M * N * N,
        bytes_accessed=(M * N + N * N) * elt + M * N * jnp.dtype(out_dtype).itemsize,
        transcendentals=0,
    )
    compiler_params = pltpu.CompilerParams(
        dimension_semantics=(("parallel", "parallel") if kt == 1
                             else ("parallel", "parallel", "arbitrary")),
        vmem_limit_bytes=32 * 1024 * 1024,
    )

    if kt == 1:
        # Fast path: whole K in one block -> no accumulator, no init/finalize.
        grid = (mt, nt)
        in_specs = [
            pl.BlockSpec((tm, Np), lambda i, j: (i, 0)),   # x rows
            pl.BlockSpec((tn, Np), lambda i, j: (j, 0)),   # W output-rows
        ]
        out_specs = pl.BlockSpec((tm, tn), lambda i, j: (i, j))
        scratch = []
        kernel = _spatial_fc_direct_kernel
    else:
        grid = (mt, nt, kt)
        # Skinny-GEMM regime: deepen the weight pipeline so its DMA stays hidden.
        if tm <= 64:
            w_spec = pl.BlockSpec((tn, tk), lambda i, j, k: (j, k),
                                  pipeline_mode=pl.Buffered(3))
        else:
            w_spec = pl.BlockSpec((tn, tk), lambda i, j, k: (j, k))
        in_specs = [
            pl.BlockSpec((tm, tk), lambda i, j, k: (i, k)),
            w_spec,
        ]
        out_specs = pl.BlockSpec((tm, tn), lambda i, j, k: (i, j))
        scratch = [pltpu.VMEM((tm, tn), jnp.float32)]
        kernel = _spatial_fc_acc_kernel

    out2 = pl.pallas_call(
        kernel,
        out_shape=jax.ShapeDtypeStruct((Mp, Np), out_dtype),
        grid_spec=pltpu.PrefetchScalarGridSpec(
            num_scalar_prefetch=0,
            grid=grid,
            in_specs=in_specs,
            out_specs=out_specs,
            scratch_shapes=scratch,
        ),
        compiler_params=compiler_params,
        cost_estimate=cost,
    )(x2, w)

    if Mp != M or Np != N:
        out2 = out2[:M, :N]
    return out2.reshape(shape)


if __name__ == "__main__":
    # Shapes consistent with the module: (B, C, H, W), spatial_shape = [16, 16]
    # -> N = 256, fc = Linear(256, 256, bias=False).
    B, C, H, W = 2, 4, 16, 16
    N = H * W

    key = jax.random.PRNGKey(0)
    kx, kw = jax.random.split(key)

    x = jax.random.normal(kx, (B, C, H, W), dtype=jnp.float32)
    # nn.Linear weight layout: (out_features, in_features).
    weight = jax.random.normal(kw, (N, N), dtype=jnp.float32) / jnp.sqrt(
        jnp.float32(N)
    )

    out = jax.block_until_ready(spatial_fc(x, weight))

    # Reference: flatten(start_dim=2) -> x @ W.T -> reshape, high precision f32.
    ref = jnp.einsum(
        "bcn,mn->bcm",
        x.reshape(B, C, N),
        weight,
        precision=jax.lax.Precision.HIGHEST,
    ).reshape(B, C, H, W)

    assert out.shape == (B, C, H, W)
    max_err = float(jnp.max(jnp.abs(out - ref)))
    # bf16 operand stream with f32 accumulation over K=256.
    assert jnp.allclose(out, ref, atol=4e-2, rtol=4e-2), max_err

    print("KERNEL_OK")
</pallas_src>

<mosaic_0001>
module attributes {stable_mosaic.version = 11 : i64} {
  func.func @_spatial_fc_direct_kernel(%arg0: i32, %arg1: i32, %arg2: memref<8x256xbf16, #tpu.memory_space<vmem>>, %arg3: memref<128x256xbf16, #tpu.memory_space<vmem>>, %arg4: memref<8x128xf32, #tpu.memory_space<vmem>>) attributes {dimension_semantics = [#tpu.dimension_semantics<parallel>, #tpu.dimension_semantics<parallel>], iteration_bounds = array<i64: 1, 2>, scalar_prefetch = 0 : i64, scratch_operands = 0 : i64, tpu.core_type = #tpu.core_type<tc>, window_params = [{transform_indices = @transform_0, window_bounds = array<i64: 8, 256>}, {transform_indices = @transform_1, window_bounds = array<i64: 128, 256>}, {transform_indices = @transform_2, window_bounds = array<i64: 8, 128>}]} {
    %c0 = arith.constant 0 : index
    %c0_0 = arith.constant 0 : index
    %0 = vector.load %arg2[%c0, %c0_0] : memref<8x256xbf16, #tpu.memory_space<vmem>>, vector<8x256xbf16>
    %c0_1 = arith.constant 0 : index
    %c0_2 = arith.constant 0 : index
    %1 = vector.load %arg3[%c0_1, %c0_2] : memref<128x256xbf16, #tpu.memory_space<vmem>>, vector<128x256xbf16>
    %cst = arith.constant dense<0.000000e+00> : vector<8x128xf32>
    %2 = tpu.matmul %0, %1, %cst {dimension_numbers = #tpu.dot_dimension_numbers<[1], [1], [0], [0], [0, 0, 1, 0], [], []>} : vector<8x256xbf16>, vector<128x256xbf16>, vector<8x128xf32> -> vector<8x128xf32>
    %c0_3 = arith.constant 0 : index
    %c0_4 = arith.constant 0 : index
    %3 = vector.load %arg4[%c0_3, %c0_4] : memref<8x128xf32, #tpu.memory_space<vmem>>, vector<8x128xf32>
    tpu.vector_store %arg4[%c0_3, %c0_4], %2 {strides = array<i32>} : memref<8x128xf32, #tpu.memory_space<vmem>>, vector<8x128xf32>,
    return
  }
  func.func @transform_0(%arg0: i32, %arg1: i32) -> (i32, i32) {
    %c0_i32 = arith.constant 0 : i32
    %c0_i32_0 = arith.constant 0 : i32
    return %arg0, %c0_i32 : i32, i32
  }
  func.func @transform_1(%arg0: i32, %arg1: i32) -> (i32, i32) {
    %c0_i32 = arith.constant 0 : i32
    %c0_i32_0 = arith.constant 0 : i32
    return %arg1, %c0_i32 : i32, i32
  }
  func.func @transform_2(%arg0: i32, %arg1: i32) -> (i32, i32) {
    %c0_i32 = arith.constant 0 : i32
    return %arg0, %arg1 : i32, i32
  }
}

</mosaic_0001>

<llo_original>
// kernel: tpu_custom_call.1
$region0: #{tpu_custom_call.1}
  #allocation0 [shape = 'u32[]', space=smem, size = 0x4, offset = 0x4, fixed_abs, tag = 'smem constant byte address 0x4 - core index']
  #allocation1 [shape = 'u32[144,128]{1,0:T(1,128)}', space=vmem, size = 0x12000, scoped, tag = 'internal scratch']
  %s0 = inlined_call_operand.hbm [shape: bf16[8,256], index: 0, kind: input, shape index: {}]
  %s1 = inlined_call_operand.hbm [shape: bf16[256,256], index: 1, kind: input, shape index: {}]
  %s2 = inlined_call_operand.hbm [shape: f32[8,256], index: 2, kind: output, shape index: {}]
  %s3 = sld [smem:[#allocation0]]
  $region49: #{tpu_custom_call.1} parent=0
    _
  %s5 = ssub.s32 1, %s3
  %s6 = scalar_select 0, %s5, %s3
  $region1: #{tpu_custom_call.1} parent=0
    #allocation2 [shape = 'u8[4096]{0}', space=vmem, size = 0x1000, scoped, tag = 'input window, operand 0, single buffered']
    #allocation3 [shape = 's32[2]{0}', space=sflag, size = 0x8, scoped, tag = 'scoped memory for tpu_custom_call.1']
    #allocation4 [shape = 's32[2]{0}', space=sflag, size = 0x8, scoped, tag = 'scoped memory for tpu_custom_call.1']
    #allocation5 [shape = 'u8[131072]{0}', space=vmem, size = 0x20000, scoped, tag = 'input window, operand 1']
    #allocation6 [shape = 's32[2]{0}', space=sflag, size = 0x8, scoped, tag = 'scoped memory for tpu_custom_call.1']
    #allocation7 [shape = 'u8[8192]{0}', space=vmem, size = 0x2000, scoped, tag = 'output window, operand 0']
    %7 = vsyncpa [#allocation3], 0
    %8 = vsyncpa [#allocation6], 0
    %s9 = scalar_lea.sflag [#allocation6], 1
    %10 = vsyncpa %s9, 0
    %11 = vsyncpa [#allocation4], 0
    %s12 = scalar_lea.sflag [#allocation4], 1
    %13 = vsyncpa %s12, 0
    loop: start=0, step=1, limit=4
    $region2: #{tpu_custom_call.1} parent=1 // loop_pre_header
      _
    $region3: #{tpu_custom_call.1} parent=1 // loop_header
      %s15 = sphi 0, %s19
      %p16 = scmp.ge.s32.totalorder %s15, 4
      %s22 = sphi 0, %s34
      %s23 = sphi 0, %s30
      %s24 = sphi 0, %s22
      %s25 = sphi 0, %s23
      %s26 = sphi 0, %s24
      %s27 = sphi 0, %s25
      %s37 = sphi 0, %s39
      %s40 = sphi 0, %s37
      %s41 = sphi 0, %s40
      %s57 = sphi 0, %s41
      %s63 = sphi 0, %s65
      %s66 = sphi 0, %s63
      %s67 = sphi 0, %s66
      %s83 = sphi 0, %s67
      %s91 = sphi 0, %s93
      %s94 = sphi 0, %s91
      %s95 = sphi 0, %s94
      %s111 = sphi 0, %s95
    $region4: #{tpu_custom_call.1} parent=1 // loop_header_branch
      %18 = sbr.rel (%p16) target = $region8
    $region5: #{tpu_custom_call.1} parent=1 // loop_body
      %s20 = ssub.s32 %s15, 1
      %s21 = ssub.s32 %s15, 2
      %s28 = sadd.s32 1, %s23
      %p29 = scmp.ge.s32.totalorder %s28, 2
      %s30 = scalar_select %p29, 0, %s28
      %s31 = sadd.s32 1, %s22
      %s32 = scalar_select %p29, %s31, %s22
      %p33 = scmp.ge.s32.totalorder %s32, 1
      %s34 = scalar_select %p33, 0, %s32
      %s35 = ssub.s32 %s22, %s34
      %p36 = scmp.eq.s32.totalorder %s35, 0
      %s38 = sadd.s32 %s37, 1
      %s39 = scalar_select %p36, %s37, %s38
      %p42 = pneg %p36
      %p43 = scmp.eq.s32.totalorder %s15, 1
      %p44 = por %p42, %p43
      %p45 = scmp.ne.s32.totalorder %s37, %s40
      %p46 = scmp.eq.s32.totalorder %s15, 0
      %p47 = por %p45, %p46
      %p48 = scmp.ne.s32.totalorder %s37, %s40
      %p49 = scmp.eq.s32.totalorder %s20, 1
      %p50 = por %p48, %p49
      %p51 = scmp.ne.s32.totalorder %s40, %s41
      %p52 = scmp.eq.s32.totalorder %s20, 0
      %p53 = por %p51, %p52
      %p54 = scmp.ne.s32.totalorder %s40, %s41
      %p55 = scmp.eq.s32.totalorder %s21, 1
      %p56 = por %p54, %p55
      %p58 = scmp.ne.s32.totalorder %s41, %s57
      %p59 = scmp.eq.s32.totalorder %s21, 0
      %p60 = por %p58, %p59
      %s61 = ssub.s32 %s23, %s30
      %p62 = scmp.eq.s32.totalorder %s61, 0
      %s64 = sadd.s32 %s63, 1
      %s65 = scalar_select %p62, %s63, %s64
      %p68 = pneg %p62
      %p69 = scmp.eq.s32.totalorder %s15, 1
      %p70 = por %p68, %p69
      %p71 = scmp.ne.s32.totalorder %s63, %s66
      %p72 = scmp.eq.s32.totalorder %s15, 0
      %p73 = por %p71, %p72
      %p74 = scmp.ne.s32.totalorder %s63, %s66
      %p75 = scmp.eq.s32.totalorder %s20, 1
      %p76 = por %p74, %p75
      %p77 = scmp.ne.s32.totalorder %s66, %s67
      %p78 = scmp.eq.s32.totalorder %s20, 0
      %p79 = por %p77, %p78
      %p80 = scmp.ne.s32.totalorder %s66, %s67
      %p81 = scmp.eq.s32.totalorder %s21, 1
      %p82 = por %p80, %p81
      %p84 = scmp.ne.s32.totalorder %s67, %s83
      %p85 = scmp.eq.s32.totalorder %s21, 0
      %p86 = por %p84, %p85
      %s87 = ssub.s32 %s22, %s34
      %s88 = ssub.s32 %s23, %s30
      %s89 = sor.u32 %s87, %s88
      %p90 = scmp.eq.s32.totalorder %s89, 0
      %s92 = sadd.s32 %s91, 1
      %s93 = scalar_select %p90, %s91, %s92
      %p96 = pneg %p90
      %p97 = scmp.eq.s32.totalorder %s15, 1
      %p98 = por %p96, %p97
      %p99 = scmp.ne.s32.totalorder %s91, %s94
      %p100 = scmp.eq.s32.totalorder %s15, 0
      %p101 = por %p99, %p100
      %p102 = scmp.ne.s32.totalorder %s91, %s94
      %p103 = scmp.eq.s32.totalorder %s20, 1
      %p104 = por %p102, %p103
      %p105 = scmp.ne.s32.totalorder %s94, %s95
      %p106 = scmp.eq.s32.totalorder %s20, 0
      %p107 = por %p105, %p106
      %p108 = scmp.ne.s32.totalorder %s94, %s95
      %p109 = scmp.eq.s32.totalorder %s21, 1
      %p110 = por %p108, %p109
      %p112 = scmp.ne.s32.totalorder %s95, %s111
      %p113 = scmp.eq.s32.totalorder %s21, 0
      %p114 = por %p112, %p113
      %p115 = scmp.le.s32.totalorder 1, %s15
      %p116 = scmp.lt.s32.totalorder %s15, 3
      %p117 = pnand %p115, %p116
      %p118 = pneg %p117
      // Predicated region
      $region9: #{tpu_custom_call.1} parent=5 // pred_check
        _
      $region10: #{tpu_custom_call.1} parent=5 // pred_check_branch
        %120 = sbr.rel (%p117) target = $region12
      $region11: #{tpu_custom_call.1} parent=5 // pred_region
        %s121 = ssub.s32 %s15, 1
        // Predicated region
        $region13: #{tpu_custom_call.1} parent=11 // pred_check
          %p122 = pneg %p53
        $region14: #{tpu_custom_call.1} parent=11 // pred_check_branch
          %124 = sbr.rel (%p122) target = $region16
        $region15: #{tpu_custom_call.1} parent=11 // pred_region
          %s126 = ssub.s32 128, 128
          %127 = vsyncadd [#allocation3], %s126
          %s128 = smul.addr %s24, 2
          %s129 = smul.addr %s128, 64
          %s130 = scalar_lea.hbm %s0, %s129
          %s132 = sshll.u32 [#allocation2], 4
          %s133 = int_to_ptr.vmem [resolvable:$true] %s132
          %135 = dma.hbm_to_vmem [thread:$0]  %s130, 128, %s133, [#allocation3]
        $region16: #{tpu_custom_call.1} parent=11 // pred_fallthru
          _
      $region12: #{tpu_custom_call.1} parent=5 // pred_fallthru
        _
      %p136 = scmp.lt.s32.totalorder %s15, 2
      // Predicated region
      $region17: #{tpu_custom_call.1} parent=5 // pred_check
        %p137 = pneg %p136
      $region18: #{tpu_custom_call.1} parent=5 // pred_check_branch
        %139 = sbr.rel (%p137) target = $region20
      $region19: #{tpu_custom_call.1} parent=5 // pred_region
        // Predicated region
        $region21: #{tpu_custom_call.1} parent=19 // pred_check
          %p140 = pneg %p73
        $region22: #{tpu_custom_call.1} parent=19 // pred_check_branch
          %142 = sbr.rel (%p140) target = $region24
        $region23: #{tpu_custom_call.1} parent=19 // pred_region
          %s143 = sand.u32 %s63, 1
          %s144 = scalar_lea.sflag [#allocation6], %s143
          %s145 = sand.u32 %s63, 1
          %s146 = smul.addr %s145, 128
          %s147 = scalar_lea.vmem [#allocation5], %s146
          %s148 = smul.u32 16, %s23
          %s150 = ssub.s32 2048, 2048
          %151 = vsyncadd %s144, %s150
          %s152 = smul.addr %s148, 2
          %s153 = smul.addr %s152, 64
          %s154 = scalar_lea.hbm %s1, %s153
          %s155 = sshll.u32 %s147, 4
          %s156 = int_to_ptr.vmem [resolvable:$true] %s155
          %161 = dma.hbm_to_vmem [thread:$0]  %s154, 2048, %s156, %s144, 128, 128, 8
        $region24: #{tpu_custom_call.1} parent=19 // pred_fallthru
          _
      $region20: #{tpu_custom_call.1} parent=5 // pred_fallthru
        _
      %p162 = scmp.le.s32.totalorder 1, %s15
      %p163 = scmp.lt.s32.totalorder %s15, 3
      %p164 = pnand %p162, %p163
      %p165 = pneg %p164
      // Predicated region
      $region25: #{tpu_custom_call.1} parent=5 // pred_check
        _
      $region26: #{tpu_custom_call.1} parent=5 // pred_check_branch
        %167 = sbr.rel (%p164) target = $region28
      $region27: #{tpu_custom_call.1} parent=5 // pred_region
        %s168 = ssub.s32 %s15, 1
        // Predicated region
        $region29: #{tpu_custom_call.1} parent=27 // pred_check
          %p169 = pneg %p53
        $region30: #{tpu_custom_call.1} parent=27 // pred_check_branch
          %171 = sbr.rel (%p169) target = $region32
        $region31: #{tpu_custom_call.1} parent=27 // pred_region
          %172 = dma.done [#allocation3], 128
        $region32: #{tpu_custom_call.1} parent=27 // pred_fallthru
          _
        %s173 = sand.u32 %s66, 1
        %s174 = scalar_lea.sflag [#allocation6], %s173
        %s175 = sand.u32 %s66, 1
        %s176 = smul.addr %s175, 128
        %s177 = scalar_lea.vmem [#allocation5], %s176
        // Predicated region
        $region33: #{tpu_custom_call.1} parent=27 // pred_check
          %p178 = pneg %p79
        $region34: #{tpu_custom_call.1} parent=27 // pred_check_branch
          %180 = sbr.rel (%p178) target = $region36
        $region35: #{tpu_custom_call.1} parent=27 // pred_region
          %181 = dma.done %s174, 2048
        $region36: #{tpu_custom_call.1} parent=27 // pred_fallthru
          _
        %p182 = pneg %p53
        %p183 = pneg %p50
        %s184 = sand.u32 %s66, 1
        %s185 = scalar_lea.sflag [#allocation6], %s184
        %s186 = sand.u32 %s66, 1
        %s187 = smul.addr %s186, 128
        %s188 = scalar_lea.vmem [#allocation5], %s187
        %p189 = pneg %p79
        %p190 = pneg %p76
        %p191 = pneg %p107
        %p192 = pneg %p104
        %s193 = sand.u32 %s94, 1
        %s194 = scalar_lea.sflag [#allocation4], %s193
        %s195 = sand.u32 %s94, 1
        %s196 = smul.addr %s195, 8
        %s197 = scalar_lea.vmem [#allocation7], %s196
        %s198 = smul.u32 16, %s25
        %v200 = vld [vmem:[#allocation2] sm:$0xff]
        %v201 = vld [vmem:[%s177] sm:$0xff]
        %v202 = vld [vmem:[%s177 + $0x8] sm:$0xff]
        %v203 = vld [vmem:[%s177 + $0x10] sm:$0xff]
        %v204 = vld [vmem:[%s177 + $0x18] sm:$0xff]
        %v205 = vld [vmem:[%s177 + $0x20] sm:$0xff]
        %v206 = vld [vmem:[%s177 + $0x28] sm:$0xff]
        %v207 = vld [vmem:[%s177 + $0x30] sm:$0xff]
        %v208 = vld [vmem:[%s177 + $0x38] sm:$0xff]
        %v209 = vld [vmem:[%s177 + $0x40] sm:$0xff]
        %v210 = vld [vmem:[%s177 + $0x48] sm:$0xff]
        %v211 = vld [vmem:[%s177 + $0x50] sm:$0xff]
        %v212 = vld [vmem:[%s177 + $0x58] sm:$0xff]
        %v213 = vld [vmem:[%s177 + $0x60] sm:$0xff]
        %v214 = vld [vmem:[%s177 + $0x68] sm:$0xff]
        %v215 = vld [vmem:[%s177 + $0x70] sm:$0xff]
        %v216 = vld [vmem:[%s177 + $0x78] sm:$0xff]
        %v218 = vunpack.c.l.b16 %v200
        %v219 = vunpack.c.h.b16 %v200
        %v220 = vpack.c.b16 %v218, %v218
        %v221 = vpack.c.b16 %v219, %v219
        %v240 = vunpack.c.l.b16 %v201
        %v241 = vunpack.c.h.b16 %v201
        %v242 = vunpack.c.l.b16 %v202
        %v243 = vunpack.c.h.b16 %v202
        %v244 = vunpack.c.l.b16 %v203
        %v245 = vunpack.c.h.b16 %v203
        %v246 = vunpack.c.l.b16 %v204
        %v247 = vunpack.c.h.b16 %v204
        %v248 = vunpack.c.l.b16 %v205
        %v249 = vunpack.c.h.b16 %v205
        %v250 = vunpack.c.l.b16 %v206
        %v251 = vunpack.c.h.b16 %v206
        %v252 = vunpack.c.l.b16 %v207
        %v253 = vunpack.c.h.b16 %v207
        %v254 = vunpack.c.l.b16 %v208
        %v255 = vunpack.c.h.b16 %v208
        %v256 = vunpack.c.l.b16 %v209
        %v257 = vunpack.c.h.b16 %v209
        %v258 = vunpack.c.l.b16 %v210
        %v259 = vunpack.c.h.b16 %v210
        %v260 = vunpack.c.l.b16 %v211
        %v261 = vunpack.c.h.b16 %v211
        %v262 = vunpack.c.l.b16 %v212
        %v263 = vunpack.c.h.b16 %v212
        %v264 = vunpack.c.l.b16 %v213
        %v265 = vunpack.c.h.b16 %v213
        %v266 = vunpack.c.l.b16 %v214
        %v267 = vunpack.c.h.b16 %v214
        %v268 = vunpack.c.l.b16 %v215
        %v269 = vunpack.c.h.b16 %v215
        %v270 = vunpack.c.l.b16 %v216
        %v271 = vunpack.c.h.b16 %v216
        %v272 = vpack.c.b16 %v242, %v240
        %v273 = vpack.c.b16 %v243, %v241
        %v274 = vpack.c.b16 %v246, %v244
        %v275 = vpack.c.b16 %v247, %v245
        %v276 = vpack.c.b16 %v250, %v248
        %v277 = vpack.c.b16 %v251, %v249
        %v278 = vpack.c.b16 %v254, %v252
        %v279 = vpack.c.b16 %v255, %v253
        %v280 = vpack.c.b16 %v258, %v256
        %v281 = vpack.c.b16 %v259, %v257
        %v282 = vpack.c.b16 %v262, %v260
        %v283 = vpack.c.b16 %v263, %v261
        %v284 = vpack.c.b16 %v266, %v264
        %v285 = vpack.c.b16 %v267, %v265
        %v286 = vpack.c.b16 %v270, %v268
        %v287 = vpack.c.b16 %v271, %v269
        %304 = vmatprep.subr.bf16.mxu0 %v273
        %305 = vmatpush1.bf16.xpose.msra.mxu0 %v272
        %306 = vmatprep.subr.bf16.mxu0 %v275
        %307 = vmatpush1.bf16.xpose.msra.mxu0 %v274
        %308 = vmatprep.subr.bf16.mxu0 %v277
        %309 = vmatpush1.bf16.xpose.msra.mxu0 %v276
        %310 = vmatprep.subr.bf16.mxu0 %v279
        %311 = vmatpush1.bf16.xpose.msra.mxu0 %v278
        %312 = vmatprep.subr.bf16.mxu0 %v281
        %313 = vmatpush1.bf16.xpose.msra.mxu0 %v280
        %314 = vmatprep.subr.bf16.mxu0 %v283
        %315 = vmatpush1.bf16.xpose.msra.mxu0 %v282
        %316 = vmatprep.subr.bf16.mxu0 %v285
        %317 = vmatpush1.bf16.xpose.msra.mxu0 %v284
        %318 = vmatprep.subr.bf16.mxu0 %v287
        %319 = vmatpush1.bf16.xpose.msra.mxu0 %v286
        %320 = vmatprep.subr.bf16.mxu0 0
        %321 = vmatpush1.bf16.xpose.msra.mxu0 0
        %322 = vmatprep.subr.bf16.mxu0 0
        %323 = vmatpush1.bf16.xpose.msra.mxu0 0
        %324 = vmatprep.subr.bf16.mxu0 0
        %325 = vmatpush1.bf16.xpose.msra.mxu0 0
        %326 = vmatprep.subr.bf16.mxu0 0
        %327 = vmatpush1.bf16.xpose.msra.mxu0 0
        %328 = vmatprep.subr.bf16.mxu0 0
        %329 = vmatpush1.bf16.xpose.msra.mxu0 0
        %330 = vmatprep.subr.bf16.mxu0 0
        %331 = vmatpush1.bf16.xpose.msra.mxu0 0
        %332 = vmatprep.subr.bf16.mxu0 0
        %333 = vmatpush1.bf16.xpose.msra.mxu0 0
        %334 = vmatprep.subr.bf16.mxu0 0
        %335 = vmatpush1.bf16.xpose.msra.mxu0 0
        %336 = vmatprep.mubr.bf16.mxu0 %v221
        %337 = vmatmul.mubr.bf16.gmra.mrb[0].mxu0 %v220
        %v338 = vpop.f32.mrb[0].mxu0
        %v339 = vadd.f32 0.0, %v338
        %v340 = vpop.f32.mrb[0].mxu0
        %v341 = vpop.f32.mrb[0].mxu0
        %v342 = vpop.f32.mrb[0].mxu0
        %343 = vdwg.mxu0
        %344 = vst [vmem:[%s197] sm:$0xff] %v339
        %s345 = sand.u32 %s94, 1
        %s346 = scalar_lea.sflag [#allocation4], %s345
        %s347 = sand.u32 %s94, 1
        %s348 = smul.addr %s347, 8
        %s349 = scalar_lea.vmem [#allocation7], %s348
        // Predicated region
        $region37: #{tpu_custom_call.1} parent=27 // pred_check
          %p350 = pneg %p104
        $region38: #{tpu_custom_call.1} parent=27 // pred_check_branch
          %352 = sbr.rel (%p350) target = $region40
        $region39: #{tpu_custom_call.1} parent=27 // pred_region
          %s354 = ssub.s32 128, 128
          %355 = vsyncadd %s346, %s354
          %s356 = smul.addr %s24, 2
          %s357 = sadd.s32 %s25, %s356
          %s358 = smul.addr %s357, 128
          %s359 = scalar_lea.hbm %s2, %s358
          %s361 = sshll.u32 %s349, 4
          %s362 = int_to_ptr.vmem [resolvable:$true] %s361
          %364 = dma.vmem_to_hbm [thread:$0]  %s362, 128, %s359, %s346
        $region40: #{tpu_custom_call.1} parent=27 // pred_fallthru
          _
      $region28: #{tpu_custom_call.1} parent=5 // pred_fallthru
        _
      %p365 = scmp.le.s32.totalorder 2, %s15
      // Predicated region
      $region41: #{tpu_custom_call.1} parent=5 // pred_check
        %p366 = pneg %p365
      $region42: #{tpu_custom_call.1} parent=5 // pred_check_branch
        %368 = sbr.rel (%p366) target = $region44
      $region43: #{tpu_custom_call.1} parent=5 // pred_region
        %s369 = ssub.s32 %s15, 2
        // Predicated region
        $region45: #{tpu_custom_call.1} parent=43 // pred_check
          %p370 = pneg %p110
        $region46: #{tpu_custom_call.1} parent=43 // pred_check_branch
          %372 = sbr.rel (%p370) target = $region48
        $region47: #{tpu_custom_call.1} parent=43 // pred_region
          %s373 = sand.u32 %s95, 1
          %s374 = scalar_lea.sflag [#allocation4], %s373
          %s375 = sand.u32 %s95, 1
          %s376 = smul.addr %s375, 8
          %s377 = scalar_lea.vmem [#allocation7], %s376
          %378 = dma.done %s374, 128
        $region48: #{tpu_custom_call.1} parent=43 // pred_fallthru
          _
      $region44: #{tpu_custom_call.1} parent=5 // pred_fallthru
        _
    $region6: #{tpu_custom_call.1} parent=1 // loop_footer
      %s19 = sadd.s32 1, %s15
    $region7: #{tpu_custom_call.1} parent=1 // loop_footer_branch
      %14 = sbr.rel target = $region3
    $region8: #{tpu_custom_call.1} parent=1 // loop_exit
      _
    %379 = vsyncpa [#allocation3], 1
    %s380 = scalar_lea.sflag [#allocation3], 1
    %381 = vsyncpa %s380, 1
    %382 = vsyncpa [#allocation6], 1
    %s383 = scalar_lea.sflag [#allocation6], 1
    %384 = vsyncpa %s383, 1
    %385 = vsyncpa [#allocation4], 1
    %s386 = scalar_lea.sflag [#allocation4], 1
    %387 = vsyncpa %s386, 1

</llo_original>
